<compile_context>
chip_gen: v5e
topology: v5e:2x2
jax: 0.10.0
libtpu: 0.0.40
codegen_flags: <defaults>
</compile_context>

<pallas_src>
import jax
import jax.numpy as jnp
from jax.experimental import pallas as pl
from jax.experimental.pallas import tpu as pltpu

EPS = 1e-5
VMEM_LIMIT_BYTES = 48 * 1024 * 1024      # explicit scoped-VMEM limit
VMEM_BUDGET_BYTES = 32 * 1024 * 1024     # target total buffer footprint


# --------------------------------------------------------------------------
# Kernels
# --------------------------------------------------------------------------
def _revin_norm_kernel(x_ref, w_ref, b_ref, y_ref, stats_ref):
    # x_ref: (TB, L, C) block covering TB batch rows.
    x = x_ref[...].astype(jnp.float32)                        # (TB, L, C)
    mean = jnp.mean(x, axis=1, keepdims=True)                 # (TB, 1, C)

    # Two-pass (numerically safe) biased variance; xc is only live here.
    xc = x - mean
    var = jnp.mean(xc * xc, axis=1, keepdims=True)
    std = jnp.sqrt(var + EPS)                                 # (TB, 1, C)

    w = w_ref[...].astype(jnp.float32)                        # (1, 1, C)
    b = b_ref[...].astype(jnp.float32)                        # (1, 1, C)

    # Fused normalize + affine: y = (x - mean)/std * w + b
    #                             = x * scale + (b - mean * scale)
    scale = w / std                                           # C-sized divide
    shift = b - mean * scale
    y_ref[...] = (x * scale + shift).astype(y_ref.dtype)

    # Merged stats writeback: one small (TB, 2, C) block per step.
    stats_ref[:, 0:1, :] = mean.astype(stats_ref.dtype)
    stats_ref[:, 1:2, :] = std.astype(stats_ref.dtype)


def _revin_denorm_kernel(x_ref, mean_ref, std_ref, w_ref, b_ref, y_ref):
    x = x_ref[...].astype(jnp.float32)                        # (TB, L, C)
    mean = mean_ref[...].astype(jnp.float32)                  # (TB, 1, C)
    std = std_ref[...].astype(jnp.float32)                    # (TB, 1, C)
    w = w_ref[...].astype(jnp.float32)                        # (1, 1, C)
    b = b_ref[...].astype(jnp.float32)                        # (1, 1, C)

    # y = ((x - b) / (w + eps^2)) * std + mean == x * s + (mean - b * s)
    s = std / (w + EPS * EPS)                                 # C-sized divide
    shift = mean - b * s
    y_ref[...] = (x * s + shift).astype(y_ref.dtype)


# --------------------------------------------------------------------------
# Tiling helpers
# --------------------------------------------------------------------------
def _round_up(x, m):
    return ((x + m - 1) // m) * m


def _sublane(itemsize):
    # 32-bit -> 8 sublanes, 16-bit -> 16, 8-bit -> 32 (sub-32-bit packs along
    # sublanes).
    return max(8, 32 // max(int(itemsize), 1))


def _pick_tb(B, L, C, in_dtype, out_dtype, *, n_f32_temps=3,
             vmem_budget_bytes=VMEM_BUDGET_BYTES, min_grid_steps=4):
    """Batch rows per grid step, sized from a layout-aware VMEM model."""
    in_item = jnp.dtype(in_dtype).itemsize
    out_item = jnp.dtype(out_dtype).itemsize
    cp = _round_up(C, 128)                                    # lane padding

    # Per-batch-row VMEM bytes: double-buffered input + output blocks (in
    # their real dtypes, sublane-padded) plus the f32 working copies the
    # kernel materialises (x, xc/var path, y).
    per_row = (
        2 * _round_up(L, _sublane(in_item)) * cp * in_item
        + 2 * _round_up(L, _sublane(out_item)) * cp * out_item
        + n_f32_temps * _round_up(L, 8) * cp * 4
    )
    budget = max(vmem_budget_bytes - (256 << 10), per_row)    # stats/w/b reserve
    cap_vmem = max(1, budget // per_row)

    # Keep >= min_grid_steps grid steps (when B allows) for DMA/compute
    # overlap; no special "halve for two cores" logic.
    cap_steps = max(1, -(-B // min_grid_steps))

    tb = int(min(B, cap_vmem, cap_steps))
    if tb <= 1 or B % tb == 0:
        return max(tb, 1)
    # Prefer an even division of B (no ragged last block) when a divisor is
    # reasonably close; otherwise accept a ragged cdiv grid.
    for d in range(tb, 0, -1):
        if B % d == 0:
            if d * 2 >= tb:
                return d
            break
    return tb


def _compiler_params():
    return pltpu.CompilerParams(
        dimension_semantics=("parallel",),
        vmem_limit_bytes=VMEM_LIMIT_BYTES,
    )


# --------------------------------------------------------------------------
# Wrappers
# --------------------------------------------------------------------------
def revin_norm(x, affine_weight, affine_bias):
    """x: (B, L, C) -> (y, mean, stdev); mean/stdev have shape (B, 1, C)."""
    B, L, C = x.shape
    w3 = affine_weight.reshape(1, 1, C).astype(jnp.float32)
    b3 = affine_bias.reshape(1, 1, C).astype(jnp.float32)

    TB = _pick_tb(B, L, C, x.dtype, x.dtype, n_f32_temps=3)
    grid = (pl.cdiv(B, TB),)

    y, stats = pl.pallas_call(
        _revin_norm_kernel,
        out_shape=(
            jax.ShapeDtypeStruct((B, L, C), x.dtype),
            jax.ShapeDtypeStruct((B, 2, C), jnp.float32),
        ),
        grid=grid,
        in_specs=[
            pl.BlockSpec((TB, L, C), lambda i: (i, 0, 0)),
            pl.BlockSpec((1, 1, C), lambda i: (0, 0, 0)),
            pl.BlockSpec((1, 1, C), lambda i: (0, 0, 0)),
        ],
        out_specs=(
            pl.BlockSpec((TB, L, C), lambda i: (i, 0, 0)),
            pl.BlockSpec((TB, 2, C), lambda i: (i, 0, 0)),
        ),
        compiler_params=_compiler_params(),
    )(x, w3, b3)

    mean = stats[:, 0:1, :]
    stdev = stats[:, 1:2, :]
    return y, mean, stdev


def revin_denorm(x, mean, stdev, affine_weight, affine_bias):
    """Inverse of revin_norm. x: (B, L, C), mean/stdev: (B, 1, C)."""
    B, L, C = x.shape
    mean = mean.reshape(B, 1, C)
    stdev = stdev.reshape(B, 1, C)
    w3 = affine_weight.reshape(1, 1, C).astype(jnp.float32)
    b3 = affine_bias.reshape(1, 1, C).astype(jnp.float32)

    TB = _pick_tb(B, L, C, x.dtype, x.dtype, n_f32_temps=2)
    grid = (pl.cdiv(B, TB),)

    return pl.pallas_call(
        _revin_denorm_kernel,
        out_shape=jax.ShapeDtypeStruct((B, L, C), x.dtype),
        grid=grid,
        in_specs=[
            pl.BlockSpec((TB, L, C), lambda i: (i, 0, 0)),
            pl.BlockSpec((TB, 1, C), lambda i: (i, 0, 0)),
            pl.BlockSpec((TB, 1, C), lambda i: (i, 0, 0)),
            pl.BlockSpec((1, 1, C), lambda i: (0, 0, 0)),
            pl.BlockSpec((1, 1, C), lambda i: (0, 0, 0)),
        ],
        out_specs=pl.BlockSpec((TB, L, C), lambda i: (i, 0, 0)),
        compiler_params=_compiler_params(),
    )(x, mean, stdev, w3, b3)


# --------------------------------------------------------------------------
# Pure-JAX reference (mirrors the PyTorch code exactly)
# --------------------------------------------------------------------------
def revin_norm_ref(x, w, b):
    mean = jnp.mean(x, axis=1, keepdims=True)
    stdev = jnp.sqrt(jnp.var(x, axis=1, keepdims=True) + EPS)  # unbiased=False
    y = (x - mean) / stdev
    y = y * w + b
    return y, mean, stdev


def revin_denorm_ref(x, mean, stdev, w, b):
    y = x - b
    y = y / (w + EPS * EPS)
    y = y * stdev
    y = y + mean
    return y


# --------------------------------------------------------------------------
if __name__ == "__main__":
    key = jax.random.PRNGKey(0)
    kx, kw, kb = jax.random.split(key, 3)

    # --- Main case: lane-dense feature dim ------------------------------
    B, L, C = 4, 16, 128
    x = jax.random.normal(kx, (B, L, C), dtype=jnp.float32) * 3.0 + 1.5
    affine_weight = 1.0 + 0.1 * jax.random.normal(kw, (C,), dtype=jnp.float32)
    affine_bias = 0.05 * jax.random.normal(kb, (C,), dtype=jnp.float32)

    # mode == 'norm'
    y, mean, stdev = revin_norm(x, affine_weight, affine_bias)
    y = jax.block_until_ready(y)
    y_ref, mean_ref, stdev_ref = revin_norm_ref(x, affine_weight, affine_bias)
    assert jnp.allclose(y, y_ref, atol=1e-5, rtol=1e-5)
    assert jnp.allclose(mean, mean_ref, atol=1e-5, rtol=1e-5)
    assert jnp.allclose(stdev, stdev_ref, atol=1e-5, rtol=1e-5)

    # mode == 'denorm' (round-trip should recover x)
    x_rec = revin_denorm(y, mean, stdev, affine_weight, affine_bias)
    x_rec = jax.block_until_ready(x_rec)
    x_rec_ref = revin_denorm_ref(y_ref, mean_ref, stdev_ref,
                                 affine_weight, affine_bias)
    assert jnp.allclose(x_rec, x_rec_ref, atol=1e-5, rtol=1e-5)
    assert jnp.allclose(x_rec, x, atol=1e-4, rtol=1e-4)

    # --- Secondary case: DCdetector-like lane-sparse C, awkward B -------
    B2, L2, C2 = 3, 10, 25
    x2 = jax.random.normal(kx, (B2, L2, C2), dtype=jnp.float32) * 0.7 - 0.3
    w2 = jnp.ones((C2,), jnp.float32)
    b2 = jnp.zeros((C2,), jnp.float32)

    y2, m2, s2 = revin_norm(x2, w2, b2)
    y2 = jax.block_until_ready(y2)
    y2_ref, m2_ref, s2_ref = revin_norm_ref(x2, w2, b2)
    assert jnp.allclose(y2, y2_ref, atol=1e-5, rtol=1e-5)
    assert jnp.allclose(m2, m2_ref, atol=1e-5, rtol=1e-5)
    assert jnp.allclose(s2, s2_ref, atol=1e-5, rtol=1e-5)

    x2_rec = revin_denorm(y2, m2, s2, w2, b2)
    x2_rec = jax.block_until_ready(x2_rec)
    assert jnp.allclose(x2_rec, x2, atol=1e-4, rtol=1e-4)

    print("KERNEL_OK")
</pallas_src>

<mosaic_0001>
module attributes {stable_mosaic.version = 11 : i64} {
  func.func @_revin_norm_kernel(%arg0: i32, %arg1: memref<1x16x128xf32, #tpu.memory_space<vmem>>, %arg2: memref<1x1x128xf32, #tpu.memory_space<vmem>>, %arg3: memref<1x1x128xf32, #tpu.memory_space<vmem>>, %arg4: memref<1x16x128xf32, #tpu.memory_space<vmem>>, %arg5: memref<1x2x128xf32, #tpu.memory_space<vmem>>) attributes {dimension_semantics = [#tpu.dimension_semantics<parallel>], iteration_bounds = array<i64: 4>, scalar_prefetch = 0 : i64, scratch_operands = 0 : i64, tpu.core_type = #tpu.core_type<tc>, window_params = [{transform_indices = @transform_0, window_bounds = array<i64: 1, 16, 128>}, {pipeline_mode = #tpu.pipeline_mode<synchronous>, transform_indices = @transform_1, window_bounds = array<i64: 1, 1, 128>}, {pipeline_mode = #tpu.pipeline_mode<synchronous>, transform_indices = @transform_2, window_bounds = array<i64: 1, 1, 128>}, {transform_indices = @transform_3, window_bounds = array<i64: 1, 16, 128>}, {transform_indices = @transform_4, window_bounds = array<i64: 1, 2, 128>}]} {
    %c0 = arith.constant 0 : index
    %c0_0 = arith.constant 0 : index
    %c0_1 = arith.constant 0 : index
    %0 = vector.load %arg1[%c0, %c0_0, %c0_1] : memref<1x16x128xf32, #tpu.memory_space<vmem>>, vector<1x16x128xf32>
    %cst = arith.constant dense<0.000000e+00> : vector<1x128xf32>
    %1 = vector.multi_reduction <add>, %0, %cst [1] : vector<1x16x128xf32> to vector<1x128xf32>
    %2 = vector.shape_cast %1 : vector<1x128xf32> to vector<1x1x128xf32>
    %cst_2 = arith.constant 1.600000e+01 : f32
    %3 = vector.broadcast %cst_2 : f32 to vector<1x1x128xf32>
    %4 = arith.divf %2, %3 : vector<1x1x128xf32>
    %5 = vector.broadcast %4 : vector<1x1x128xf32> to vector<1x16x128xf32>
    %6 = arith.subf %0, %5 : vector<1x16x128xf32>
    %7 = arith.mulf %6, %6 : vector<1x16x128xf32>
    %cst_3 = arith.constant dense<0.000000e+00> : vector<1x128xf32>
    %8 = vector.multi_reduction <add>, %7, %cst_3 [1] : vector<1x16x128xf32> to vector<1x128xf32>
    %9 = vector.shape_cast %8 : vector<1x128xf32> to vector<1x1x128xf32>
    %cst_4 = arith.constant 1.600000e+01 : f32
    %10 = vector.broadcast %cst_4 : f32 to vector<1x1x128xf32>
    %11 = arith.divf %9, %10 : vector<1x1x128xf32>
    %cst_5 = arith.constant 9.99999974E-6 : f32
    %12 = vector.broadcast %cst_5 : f32 to vector<1x1x128xf32>
    %13 = arith.addf %11, %12 : vector<1x1x128xf32>
    %14 = math.sqrt %13 : vector<1x1x128xf32>
    %c0_6 = arith.constant 0 : index
    %c0_7 = arith.constant 0 : index
    %c0_8 = arith.constant 0 : index
    %15 = vector.load %arg2[%c0_6, %c0_7, %c0_8] : memref<1x1x128xf32, #tpu.memory_space<vmem>>, vector<1x1x128xf32>
    %c0_9 = arith.constant 0 : index
    %c0_10 = arith.constant 0 : index
    %c0_11 = arith.constant 0 : index
    %16 = vector.load %arg3[%c0_9, %c0_10, %c0_11] : memref<1x1x128xf32, #tpu.memory_space<vmem>>, vector<1x1x128xf32>
    %17 = arith.divf %15, %14 : vector<1x1x128xf32>
    %18 = arith.mulf %4, %17 : vector<1x1x128xf32>
    %19 = arith.subf %16, %18 : vector<1x1x128xf32>
    %20 = vector.broadcast %17 : vector<1x1x128xf32> to vector<1x16x128xf32>
    %21 = arith.mulf %0, %20 : vector<1x16x128xf32>
    %22 = vector.broadcast %19 : vector<1x1x128xf32> to vector<1x16x128xf32>
    %23 = arith.addf %21, %22 : vector<1x16x128xf32>
    %c0_12 = arith.constant 0 : index
    %c0_13 = arith.constant 0 : index
    %c0_14 = arith.constant 0 : index
    %24 = vector.load %arg4[%c0_12, %c0_13, %c0_14] : memref<1x16x128xf32, #tpu.memory_space<vmem>>, vector<1x16x128xf32>
    tpu.vector_store %arg4[%c0_12, %c0_13, %c0_14], %23 {strides = array<i32>} : memref<1x16x128xf32, #tpu.memory_space<vmem>>, vector<1x16x128xf32>,
    %c0_15 = arith.constant 0 : index
    %c0_16 = arith.constant 0 : index
    %c0_17 = arith.constant 0 : index
    %25 = vector.load %arg5[%c0_15, %c0_16, %c0_17] : memref<1x2x128xf32, #tpu.memory_space<vmem>>, vector<1x1x128xf32>
    tpu.vector_store %arg5[%c0_15, %c0_16, %c0_17], %4 {strides = array<i32>} : memref<1x2x128xf32, #tpu.memory_space<vmem>>, vector<1x1x128xf32>,
    %c0_18 = arith.constant 0 : index
    %c1 = arith.constant 1 : index
    %c0_19 = arith.constant 0 : index
    %26 = vector.load %arg5[%c0_18, %c1, %c0_19] : memref<1x2x128xf32, #tpu.memory_space<vmem>>, vector<1x1x128xf32>
    tpu.vector_store %arg5[%c0_18, %c1, %c0_19], %14 {strides = array<i32>} : memref<1x2x128xf32, #tpu.memory_space<vmem>>, vector<1x1x128xf32>,
    return
  }
  func.func @transform_0(%arg0: i32) -> (i32, i32, i32) {
    %c0_i32 = arith.constant 0 : i32
    %c0_i32_0 = arith.constant 0 : i32
    %c0_i32_1 = arith.constant 0 : i32
    return %arg0, %c0_i32, %c0_i32_0 : i32, i32, i32
  }
  func.func @transform_1(%arg0: i32) -> (i32, i32, i32) {
    %c0_i32 = arith.constant 0 : i32
    %c0_i32_0 = arith.constant 0 : i32
    %c0_i32_1 = arith.constant 0 : i32
    %c0_i32_2 = arith.constant 0 : i32
    return %c0_i32, %c0_i32_0, %c0_i32_1 : i32, i32, i32
  }
  func.func @transform_2(%arg0: i32) -> (i32, i32, i32) {
    %c0_i32 = arith.constant 0 : i32
    %c0_i32_0 = arith.constant 0 : i32
    %c0_i32_1 = arith.constant 0 : i32
    %c0_i32_2 = arith.constant 0 : i32
    return %c0_i32, %c0_i32_0, %c0_i32_1 : i32, i32, i32
  }
  func.func @transform_3(%arg0: i32) -> (i32, i32, i32) {
    %c0_i32 = arith.constant 0 : i32
    %c0_i32_0 = arith.constant 0 : i32
    %c0_i32_1 = arith.constant 0 : i32
    return %arg0, %c0_i32, %c0_i32_0 : i32, i32, i32
  }
  func.func @transform_4(%arg0: i32) -> (i32, i32, i32) {
    %c0_i32 = arith.constant 0 : i32
    %c0_i32_0 = arith.constant 0 : i32
    %c0_i32_1 = arith.constant 0 : i32
    return %arg0, %c0_i32, %c0_i32_0 : i32, i32, i32
  }
}

</mosaic_0001>

<llo_original>
// kernel: tpu_custom_call.1
$region0: #{tpu_custom_call.1}
  #allocation0 [shape = 'u32[]', space=smem, size = 0x4, offset = 0x4, fixed_abs, tag = 'smem constant byte address 0x4 - core index']
  #allocation1 [shape = 'u32[72,128]{1,0:T(1,128)}', space=vmem, size = 0x9000, scoped, tag = 'internal scratch']
  %s0 = inlined_call_operand.hbm [shape: f32[4,16,128], index: 0, kind: input, shape index: {}]
  %s1 = inlined_call_operand.hbm [shape: f32[1,1,128], index: 1, kind: input, shape index: {}]
  %s2 = inlined_call_operand.vmem [shape: f32[1,1,128], index: 2, kind: input, shape index: {}]
  %s3 = inlined_call_operand.hbm [shape: f32[4,16,128], index: 3, kind: output, shape index: {0}]
  %s4 = inlined_call_operand.hbm [shape: f32[4,2,128], index: 4, kind: output, shape index: {1}]
  %5 = xla_tuple %s3, %s4
  %s6 = sld [smem:[#allocation0]]
  $region61: #{tpu_custom_call.1} parent=0
    _
  %s8 = ssub.s32 1, %s6
  %s9 = scalar_select 0, %s8, %s6
  $region1: #{tpu_custom_call.1} parent=0
    #allocation2 [shape = 'u8[16384]{0}', space=vmem, size = 0x4000, scoped, tag = 'input window, operand 0']
    #allocation3 [shape = 's32[2]{0}', space=sflag, size = 0x8, scoped, tag = 'scoped memory for tpu_custom_call.1']
    #allocation4 [shape = 's32[2]{0}', space=sflag, size = 0x8, scoped, tag = 'scoped memory for tpu_custom_call.1']
    #allocation5 [shape = 'u8[512]{0}', space=vmem, size = 0x400, scoped, tag = 'input window, operand 1, single buffered']
    #allocation6 [shape = 's32[1]{0}', space=sflag, size = 0x4, scoped, tag = 'scoped memory for tpu_custom_call.1']
    #allocation7 [shape = 'u8[16384]{0}', space=vmem, size = 0x4000, scoped, tag = 'output window, operand 0']
    #allocation8 [shape = 'u8[2048]{0}', space=vmem, size = 0x800, scoped, tag = 'output window, operand 1']
    #allocation9 [shape = 's32[2]{0}', space=sflag, size = 0x8, scoped, tag = 'scoped memory for tpu_custom_call.1']
    %10 = vsyncpa [#allocation3], 0
    %s11 = scalar_lea.sflag [#allocation3], 1
    %12 = vsyncpa %s11, 0
    %13 = vsyncpa [#allocation6], 0
    %14 = vsyncpa [#allocation4], 0
    %s15 = scalar_lea.sflag [#allocation4], 1
    %16 = vsyncpa %s15, 0
    %17 = vsyncpa [#allocation9], 0
    %s18 = scalar_lea.sflag [#allocation9], 1
    %19 = vsyncpa %s18, 0
    loop: start=0, step=1, limit=6
    $region2: #{tpu_custom_call.1} parent=1 // loop_pre_header
      _
    $region3: #{tpu_custom_call.1} parent=1 // loop_header
      %s21 = sphi 0, %s25
      %p22 = scmp.ge.s32.totalorder %s21, 6
      %s31 = sphi 0, %s33
      %s34 = sphi 0, %s31
      %s35 = sphi 0, %s34
      %s51 = sphi 0, %s35
      %s55 = sphi 0, %s55
      %s57 = sphi 0, %s55
      %s58 = sphi 0, %s57
      %s72 = sphi 0, %s58
      %s76 = sphi 0, %s76
      %s78 = sphi 0, %s76
      %s79 = sphi 0, %s78
      %s93 = sphi 0, %s79
      %s99 = sphi 0, %s101
      %s102 = sphi 0, %s99
      %s103 = sphi 0, %s102
      %s119 = sphi 0, %s103
      %s125 = sphi 0, %s127
      %s128 = sphi 0, %s125
      %s129 = sphi 0, %s128
      %s145 = sphi 0, %s129
    $region4: #{tpu_custom_call.1} parent=1 // loop_header_branch
      %24 = sbr.rel (%p22) target = $region8
    $region5: #{tpu_custom_call.1} parent=1 // loop_body
      %s26 = ssub.s32 %s21, 1
      %s27 = ssub.s32 %s21, 2
      %s28 = sadd.s32 %s21, 1
      %s29 = ssub.s32 %s21, %s28
      %p30 = scmp.eq.s32.totalorder %s29, 0
      %s32 = sadd.s32 %s31, 1
      %s33 = scalar_select %p30, %s31, %s32
      %p36 = pneg %p30
      %p37 = scmp.eq.s32.totalorder %s21, 3
      %p38 = por %p36, %p37
      %p39 = scmp.ne.s32.totalorder %s31, %s34
      %p40 = scmp.eq.s32.totalorder %s21, 0
      %p41 = por %p39, %p40
      %p42 = scmp.ne.s32.totalorder %s31, %s34
      %p43 = scmp.eq.s32.totalorder %s26, 3
      %p44 = por %p42, %p43
      %p45 = scmp.ne.s32.totalorder %s34, %s35
      %p46 = scmp.eq.s32.totalorder %s26, 0
      %p47 = por %p45, %p46
      %p48 = scmp.ne.s32.totalorder %s34, %s35
      %p49 = scmp.eq.s32.totalorder %s27, 3
      %p50 = por %p48, %p49
      %p52 = scmp.ne.s32.totalorder %s35, %s51
      %p53 = scmp.eq.s32.totalorder %s27, 0
      %p54 = por %p52, %p53
      %s56 = sadd.s32 %s55, 1
      %p59 = scmp.eq.s32.totalorder %s21, 3
      %p60 = scmp.ne.s32.totalorder %s55, %s57
      %p61 = scmp.eq.s32.totalorder %s21, 0
      %p62 = por %p60, %p61
      %p63 = scmp.ne.s32.totalorder %s55, %s57
      %p64 = scmp.eq.s32.totalorder %s26, 3
      %p65 = por %p63, %p64
      %p66 = scmp.ne.s32.totalorder %s57, %s58
      %p67 = scmp.eq.s32.totalorder %s26, 0
      %p68 = por %p66, %p67
      %p69 = scmp.ne.s32.totalorder %s57, %s58
      %p70 = scmp.eq.s32.totalorder %s27, 3
      %p71 = por %p69, %p70
      %p73 = scmp.ne.s32.totalorder %s58, %s72
      %p74 = scmp.eq.s32.totalorder %s27, 0
      %p75 = por %p73, %p74
      %s77 = sadd.s32 %s76, 1
      %p80 = scmp.eq.s32.totalorder %s21, 3
      %p81 = scmp.ne.s32.totalorder %s76, %s78
      %p82 = scmp.eq.s32.totalorder %s21, 0
      %p83 = por %p81, %p82
      %p84 = scmp.ne.s32.totalorder %s76, %s78
      %p85 = scmp.eq.s32.totalorder %s26, 3
      %p86 = por %p84, %p85
      %p87 = scmp.ne.s32.totalorder %s78, %s79
      %p88 = scmp.eq.s32.totalorder %s26, 0
      %p89 = por %p87, %p88
      %p90 = scmp.ne.s32.totalorder %s78, %s79
      %p91 = scmp.eq.s32.totalorder %s27, 3
      %p92 = por %p90, %p91
      %p94 = scmp.ne.s32.totalorder %s79, %s93
      %p95 = scmp.eq.s32.totalorder %s27, 0
      %p96 = por %p94, %p95
      %s97 = ssub.s32 %s21, %s28
      %p98 = scmp.eq.s32.totalorder %s97, 0
      %s100 = sadd.s32 %s99, 1
      %s101 = scalar_select %p98, %s99, %s100
      %p104 = pneg %p98
      %p105 = scmp.eq.s32.totalorder %s21, 3
      %p106 = por %p104, %p105
      %p107 = scmp.ne.s32.totalorder %s99, %s102
      %p108 = scmp.eq.s32.totalorder %s21, 0
      %p109 = por %p107, %p108
      %p110 = scmp.ne.s32.totalorder %s99, %s102
      %p111 = scmp.eq.s32.totalorder %s26, 3
      %p112 = por %p110, %p111
      %p113 = scmp.ne.s32.totalorder %s102, %s103
      %p114 = scmp.eq.s32.totalorder %s26, 0
      %p115 = por %p113, %p114
      %p116 = scmp.ne.s32.totalorder %s102, %s103
      %p117 = scmp.eq.s32.totalorder %s27, 3
      %p118 = por %p116, %p117
      %p120 = scmp.ne.s32.totalorder %s103, %s119
      %p121 = scmp.eq.s32.totalorder %s27, 0
      %p122 = por %p120, %p121
      %s123 = ssub.s32 %s21, %s28
      %p124 = scmp.eq.s32.totalorder %s123, 0
      %s126 = sadd.s32 %s125, 1
      %s127 = scalar_select %p124, %s125, %s126
      %p130 = pneg %p124
      %p131 = scmp.eq.s32.totalorder %s21, 3
      %p132 = por %p130, %p131
      %p133 = scmp.ne.s32.totalorder %s125, %s128
      %p134 = scmp.eq.s32.totalorder %s21, 0
      %p135 = por %p133, %p134
      %p136 = scmp.ne.s32.totalorder %s125, %s128
      %p137 = scmp.eq.s32.totalorder %s26, 3
      %p138 = por %p136, %p137
      %p139 = scmp.ne.s32.totalorder %s128, %s129
      %p140 = scmp.eq.s32.totalorder %s26, 0
      %p141 = por %p139, %p140
      %p142 = scmp.ne.s32.totalorder %s128, %s129
      %p143 = scmp.eq.s32.totalorder %s27, 3
      %p144 = por %p142, %p143
      %p146 = scmp.ne.s32.totalorder %s129, %s145
      %p147 = scmp.eq.s32.totalorder %s27, 0
      %p148 = por %p146, %p147
      %p149 = scmp.le.s32.totalorder 1, %s21
      %p150 = scmp.lt.s32.totalorder %s21, 5
      %p151 = pnand %p149, %p150
      %p152 = pneg %p151
      // Predicated region
      $region9: #{tpu_custom_call.1} parent=5 // pred_check
        _
      $region10: #{tpu_custom_call.1} parent=5 // pred_check_branch
        %154 = sbr.rel (%p151) target = $region12
      $region11: #{tpu_custom_call.1} parent=5 // pred_region
        %s155 = ssub.s32 %s21, 1
        // Predicated region
        $region13: #{tpu_custom_call.1} parent=11 // pred_check
          %p156 = pneg %p68
        $region14: #{tpu_custom_call.1} parent=11 // pred_check_branch
          %158 = sbr.rel (%p156) target = $region16
        $region15: #{tpu_custom_call.1} parent=11 // pred_region
          %160 = vsyncadd [#allocation6], 0
          %s162 = sshll.u32 %s1, 4
          %s163 = int_to_ptr.hbm [resolvable:$true] %s162
          %s164 = sshll.u32 [#allocation5], 4
          %s165 = int_to_ptr.vmem [resolvable:$true] %s164
          %167 = dma.hbm_to_vmem [thread:$0]  %s163, 16, %s165, [#allocation6]
        $region16: #{tpu_custom_call.1} parent=11 // pred_fallthru
          _
        // Predicated region
        $region17: #{tpu_custom_call.1} parent=11 // pred_check
          %p168 = pneg %p89
        $region18: #{tpu_custom_call.1} parent=11 // pred_check_branch
          %170 = sbr.rel (%p168) target = $region20
        $region19: #{tpu_custom_call.1} parent=11 // pred_region
          _
        $region20: #{tpu_custom_call.1} parent=11 // pred_fallthru
          _
      $region12: #{tpu_custom_call.1} parent=5 // pred_fallthru
        _
      %p171 = scmp.lt.s32.totalorder %s21, 4
      // Predicated region
      $region21: #{tpu_custom_call.1} parent=5 // pred_check
        %p172 = pneg %p171
      $region22: #{tpu_custom_call.1} parent=5 // pred_check_branch
        %174 = sbr.rel (%p172) target = $region24
      $region23: #{tpu_custom_call.1} parent=5 // pred_region
        // Predicated region
        $region25: #{tpu_custom_call.1} parent=23 // pred_check
          %p175 = pneg %p41
        $region26: #{tpu_custom_call.1} parent=23 // pred_check_branch
          %177 = sbr.rel (%p175) target = $region28
        $region27: #{tpu_custom_call.1} parent=23 // pred_region
          %s178 = sand.u32 %s31, 1
          %s179 = scalar_lea.sflag [#allocation3], %s178
          %s180 = sand.u32 %s31, 1
          %s181 = smul.addr %s180, 16
          %s182 = scalar_lea.vmem [#allocation2], %s181
          %184 = vsyncadd %s179, 0
          %s185 = smul.addr %s21, 2
          %s186 = smul.addr %s185, 8
          %s187 = scalar_lea.hbm %s0, %s186
          %s188 = sshll.u32 %s187, 4
          %s189 = int_to_ptr.hbm [resolvable:$true] %s188
          %s190 = sshll.u32 %s182, 4
          %s191 = int_to_ptr.vmem [resolvable:$true] %s190
          %196 = dma.hbm_to_vmem [thread:$0]  %s189, 256, %s191, %s179, 128, 128, 8
        $region28: #{tpu_custom_call.1} parent=23 // pred_fallthru
          _
      $region24: #{tpu_custom_call.1} parent=5 // pred_fallthru
        _
      %p197 = scmp.le.s32.totalorder 1, %s21
      %p198 = scmp.lt.s32.totalorder %s21, 5
      %p199 = pnand %p197, %p198
      %p200 = pneg %p199
      // Predicated region
      $region29: #{tpu_custom_call.1} parent=5 // pred_check
        _
      $region30: #{tpu_custom_call.1} parent=5 // pred_check_branch
        %202 = sbr.rel (%p199) target = $region32
      $region31: #{tpu_custom_call.1} parent=5 // pred_region
        %s203 = ssub.s32 %s21, 1
        %s204 = sand.u32 %s34, 1
        %s205 = scalar_lea.sflag [#allocation3], %s204
        %s206 = sand.u32 %s34, 1
        %s207 = smul.addr %s206, 16
        %s208 = scalar_lea.vmem [#allocation2], %s207
        // Predicated region
        $region33: #{tpu_custom_call.1} parent=31 // pred_check
          %p209 = pneg %p47
        $region34: #{tpu_custom_call.1} parent=31 // pred_check_branch
          %211 = sbr.rel (%p209) target = $region36
        $region35: #{tpu_custom_call.1} parent=31 // pred_region
          %213 = dma.done %s205, 256
        $region36: #{tpu_custom_call.1} parent=31 // pred_fallthru
          _
        // Predicated region
        $region37: #{tpu_custom_call.1} parent=31 // pred_check
          %p214 = pneg %p68
        $region38: #{tpu_custom_call.1} parent=31 // pred_check_branch
          %216 = sbr.rel (%p214) target = $region40
        $region39: #{tpu_custom_call.1} parent=31 // pred_region
          %218 = dma.done [#allocation6], 16
        $region40: #{tpu_custom_call.1} parent=31 // pred_fallthru
          _
        %s219 = sand.u32 %s34, 1
        %s220 = scalar_lea.sflag [#allocation3], %s219
        %s221 = sand.u32 %s34, 1
        %s222 = smul.addr %s221, 16
        %s223 = scalar_lea.vmem [#allocation2], %s222
        %p224 = pneg %p47
        %p225 = pneg %p44
        %p226 = pneg %p68
        %p227 = pneg %p65
        %p228 = pneg %p89
        %p229 = pneg %p86
        %p230 = pneg %p115
        %p231 = pneg %p112
        %s232 = sand.u32 %s102, 1
        %s233 = scalar_lea.sflag [#allocation4], %s232
        %s234 = sand.u32 %s102, 1
        %s235 = smul.addr %s234, 16
        %s236 = scalar_lea.vmem [#allocation7], %s235
        %p237 = pneg %p141
        %p238 = pneg %p138
        %s239 = sand.u32 %s128, 1
        %s240 = scalar_lea.sflag [#allocation9], %s239
        %s241 = sand.u32 %s128, 1
        %s242 = smul.addr %s241, 2
        %s243 = scalar_lea.vmem [#allocation8], %s242
        %v244 = vld [vmem:[%s208] sm:$0xff]
        %v245 = vld [vmem:[%s208 + $0x8] sm:$0xff]
        %v246 = vadd.f32 %v244, %v245
        %v247 = vrot.slane %v246, 4
        %v248 = vadd.f32 %v246, %v247
        %v249 = vrot.slane %v248, 2
        %v250 = vadd.f32 %v248, %v249
        %v251 = vrot.slane %v250, 1
        %v252 = vadd.f32 %v250, %v251
        %v253 = vrcp.pop 16.0
        %v254 = vmul.f32 16.0, %v253
        %v255 = vsub.f32 1.0, %v254
        %v256 = vmul.f32 %v253, %v255
        %v257 = vadd.f32 %v253, %v256
        %vm258 = vweird.f32 %v253
        %v259 = vsel %vm258, %v253, %v257
        %v260 = vmul.f32 %v252, %v259
        %v261 = vsub.f32 %v244, %v260
        %v262 = vsub.f32 %v245, %v260
        %v263 = vmul.f32 %v261, %v261
        %v264 = vmul.f32 %v262, %v262
        %v265 = vadd.f32 %v263, %v264
        %v266 = vrot.slane %v265, 4
        %v267 = vadd.f32 %v265, %v266
        %v268 = vrot.slane %v267, 2
        %v269 = vadd.f32 %v267, %v268
        %v270 = vrot.slane %v269, 1
        %v271 = vadd.f32 %v269, %v270
        %v272 = vmul.f32 %v271, %v259
        %v273 = vadd.f32 %v272, 1e-05
        %v274 = vrsqrt.pop %v273
        %v275 = vmul.f32 %v274, %v273
        %v276 = vmul.f32 %v275, %v274
        %v277 = vmul.f32 0.5, %v276
        %v278 = vsub.f32 1.5, %v277
        %v279 = vmul.f32 %v274, %v278
        %v280 = vmul.f32 %v273, %v279
        %vm281 = vcmp.eq.f32.partialorder %v273, inf
        %v282 = vsel %vm281, %v273, %v280
        %vm283 = vcmp.eq.f32.partialorder %v273, 0.0
        %v284 = vand.u32 %v273, 2147483648
        %v285 = vsel %vm283, %v284, %v282
        %v286 = vld [vmem:[#allocation5] sm:$0x1]
        %v287 = vld [vmem:[%s2] sm:$0x1]
        %v288 = vrcp.pop %v285
        %v289 = vmul.f32 %v285, %v288
        %v290 = vsub.f32 1.0, %v289
        %v291 = vmul.f32 %v288, %v290
        %v292 = vadd.f32 %v288, %v291
        %vm293 = vweird.f32 %v285
        %vm294 = vweird.f32 %v288
        %vm295 = vmor %vm293, %vm294
        %v296 = vsel %vm295, %v288, %v292
        %v297 = vand.u32 2147483647, %v285
        %vm298 = vcmp.eq.f32.partialorder %v297, 8.507059e+37
        %v299 = vand.u32 %v285, 2147483648
        %v300 = vor.u32 1.1754944e-38, %v299
        %v301 = vsel %vm298, %v300, %v296
        %v302 = vmul.f32 %v286, %v301
        %v303 = vmul.f32 %v260, %v302
        %v304 = vsub.f32 %v287, %v303
        %v306 = vperm.slane %v302, 0
        %v308 = vmul.f32 %v244, %v306
        %v309 = vmul.f32 %v245, %v306
        %v311 = vperm.slane %v304, 0
        %v313 = vadd.f32 %v308, %v311
        %v314 = vadd.f32 %v309, %v311
        %315 = vst [vmem:[%s236] sm:$0xff] %v313
        %316 = vst [vmem:[%s236 + $0x8] sm:$0xff] %v314
        %317 = vst [vmem:[%s243] sm:$0x1] %v260
        %318 = vst [vmem:[%s243 + $0x1] sm:$0x1] %v285
        %s319 = sand.u32 %s102, 1
        %s320 = scalar_lea.sflag [#allocation4], %s319
        %s321 = sand.u32 %s102, 1
        %s322 = smul.addr %s321, 16
        %s323 = scalar_lea.vmem [#allocation7], %s322
        %s324 = sand.u32 %s128, 1
        %s325 = scalar_lea.sflag [#allocation9], %s324
        %s326 = sand.u32 %s128, 1
        %s327 = smul.addr %s326, 2
        %s328 = scalar_lea.vmem [#allocation8], %s327
        // Predicated region
        $region41: #{tpu_custom_call.1} parent=31 // pred_check
          %p329 = pneg %p112
        $region42: #{tpu_custom_call.1} parent=31 // pred_check_branch
          %331 = sbr.rel (%p329) target = $region44
        $region43: #{tpu_custom_call.1} parent=31 // pred_region
          %333 = vsyncadd %s320, 0
          %s334 = smul.addr %s26, 2
          %s335 = smul.addr %s334, 8
          %s336 = scalar_lea.hbm %s3, %s335
          %s337 = sshll.u32 %s323, 4
          %s338 = int_to_ptr.vmem [resolvable:$true] %s337
          %s339 = sshll.u32 %s336, 4
          %s340 = int_to_ptr.hbm [resolvable:$true] %s339
          %345 = dma.vmem_to_hbm [thread:$0]  %s338, 256, %s340, %s320, 128, 128, 8
        $region44: #{tpu_custom_call.1} parent=31 // pred_fallthru
          _
        // Predicated region
        $region45: #{tpu_custom_call.1} parent=31 // pred_check
          %p346 = pneg %p138
        $region46: #{tpu_custom_call.1} parent=31 // pred_check_branch
          %348 = sbr.rel (%p346) target = $region48
        $region47: #{tpu_custom_call.1} parent=31 // pred_region
          %350 = vsyncadd %s325, 0
          %s351 = smul.addr %s26, 2
          %s352 = scalar_lea.hbm %s4, %s351
          %s354 = sshll.u32 %s328, 4
          %s355 = int_to_ptr.vmem [resolvable:$true] %s354
          %s356 = sshll.u32 %s352, 4
          %s357 = int_to_ptr.hbm [resolvable:$true] %s356
          %359 = dma.vmem_to_hbm [thread:$0]  %s355, 32, %s357, %s325
        $region48: #{tpu_custom_call.1} parent=31 // pred_fallthru
          _
      $region32: #{tpu_custom_call.1} parent=5 // pred_fallthru
        _
      %p360 = scmp.le.s32.totalorder 2, %s21
      // Predicated region
      $region49: #{tpu_custom_call.1} parent=5 // pred_check
        %p361 = pneg %p360
      $region50: #{tpu_custom_call.1} parent=5 // pred_check_branch
        %363 = sbr.rel (%p361) target = $region52
      $region51: #{tpu_custom_call.1} parent=5 // pred_region
        %s364 = ssub.s32 %s21, 2
        // Predicated region
        $region53: #{tpu_custom_call.1} parent=51 // pred_check
          %p365 = pneg %p118
        $region54: #{tpu_custom_call.1} parent=51 // pred_check_branch
          %367 = sbr.rel (%p365) target = $region56
        $region55: #{tpu_custom_call.1} parent=51 // pred_region
          %s368 = sand.u32 %s103, 1
          %s369 = scalar_lea.sflag [#allocation4], %s368
          %s370 = sand.u32 %s103, 1
          %s371 = smul.addr %s370, 16
          %s372 = scalar_lea.vmem [#allocation7], %s371
          %374 = dma.done %s369, 256
        $region56: #{tpu_custom_call.1} parent=51 // pred_fallthru
          _
        // Predicated region
        $region57: #{tpu_custom_call.1} parent=51 // pred_check
          %p375 = pneg %p144
        $region58: #{tpu_custom_call.1} parent=51 // pred_check_branch
          %377 = sbr.rel (%p375) target = $region60
        $region59: #{tpu_custom_call.1} parent=51 // pred_region
          %s378 = sand.u32 %s129, 1
          %s379 = scalar_lea.sflag [#allocation9], %s378
          %s380 = sand.u32 %s129, 1
          %s381 = smul.addr %s380, 2
          %s382 = scalar_lea.vmem [#allocation8], %s381
          %384 = dma.done %s379, 32
        $region60: #{tpu_custom_call.1} parent=51 // pred_fallthru
          _
      $region52: #{tpu_custom_call.1} parent=5 // pred_fallthru
        _
    $region6: #{tpu_custom_call.1} parent=1 // loop_footer
      %s25 = sadd.s32 1, %s21
    $region7: #{tpu_custom_call.1} parent=1 // loop_footer_branch
      %20 = sbr.rel target = $region3
    $region8: #{tpu_custom_call.1} parent=1 // loop_exit
      _
    %385 = vsyncpa [#allocation3], 1
    %s386 = scalar_lea.sflag [#allocation3], 1
    %387 = vsyncpa %s386, 1
    %388 = vsyncpa [#allocation6], 1
    %389 = vsyncpa [#allocation4], 1
    %s390 = scalar_lea.sflag [#allocation4], 1
    %391 = vsyncpa %s390, 1
    %392 = vsyncpa [#allocation9], 1
    %s393 = scalar_lea.sflag [#allocation9], 1
    %394 = vsyncpa %s393, 1

</llo_original>
